<compile_context>
chip_gen: v5e
topology: v5e:2x2
jax: 0.10.0
libtpu: 0.0.40
codegen_flags: <defaults>
</compile_context>

<pallas_src>
import functools

import jax
import jax.numpy as jnp
from jax.experimental import pallas as pl
from jax.experimental.pallas import tpu as pltpu

_MIN_GRID_STEPS_MAIN = 8      # enough steps to pipeline DMA and feed 2 TCs (v7x)
_MIN_GRID_STEPS_FALLBACK = 4


def _divisors_desc(n):
    return [d for d in range(n, 0, -1) if n % d == 0]


def _pick_tile(axis_len, candidates, unit_bytes, budget, other_steps, min_steps):
    """Largest candidate tile that fits the per-step byte budget while still leaving
    enough total grid steps for software pipelining / megacore sharding."""
    fitting = [t for t in candidates if t * unit_bytes <= budget] or [min(candidates)]
    enough = [t for t in fitting if (axis_len // t) * other_steps >= min_steps]
    return max(enough) if enough else min(fitting)


def _tpu_vmem_capacity_bytes():
    try:
        info = pltpu.get_tpu_info()
        cap = getattr(info, "vmem_capacity_bytes", None)
        if cap:
            return int(cap)
    except Exception:
        pass
    return 64 << 20   # conservative default (v7x per-TensorCore VMEM)


def _s2d_transpose_kernel(x_ref, o_ref):
    # x_ref block: (1, T, 1, dW, bs*C)  NHWC rows of one bh for a dh-tile
    # o_ref block: (1, 1, bs*C, T*dW)   NCHW output slab for this bh (lane-dense)
    t, dw, j = x_ref.shape[1], x_ref.shape[3], x_ref.shape[4]
    m = x_ref[0, :, 0, :, :].reshape(t * dw, j)     # free merge (dW sublane-aligned)
    # One aligned 2-D XLU transpose per grid step; cast AFTER the transpose.
    o_ref[0, 0, :, :] = m.T.astype(o_ref.dtype)


def _cast_copy_kernel(x_ref, o_ref):
    o_ref[...] = x_ref[...].astype(o_ref.dtype)


@functools.partial(jax.jit, static_argnums=1)
def shape_pool_2d(x_nchw, block_size):
    """Pallas implementation of ShapePool2D.forward (NCHW in, NCHW float32 out)."""
    B, C, H, W = x_nchw.shape
    bs = block_size
    assert H % bs == 0 and W % bs == 0, "H and W must be divisible by block_size"
    dH, dW = H // bs, W // bs
    D = C * bs * bs
    out_dtype = jnp.float32           # PyTorch forward allocates a FloatTensor.
    in_isz = jnp.dtype(x_nchw.dtype).itemsize
    out_isz = jnp.dtype(out_dtype).itemsize

    vmem_cap = _tpu_vmem_capacity_bytes()
    # Per-step (in+out) byte budget: bigger on 128 MiB-VMEM parts (v5e/v6e), a bit
    # smaller on 64 MiB-VMEM parts (v7x) so double-buffering + temps stay well clear.
    budget = (16 << 20) if vmem_cap >= (100 << 20) else (10 << 20)
    vmem_cap_limit = max(min(vmem_cap - (12 << 20), 100 << 20), 32 << 20)

    total_bytes = int(x_nchw.size) * in_isz + B * D * dH * dW * out_isz
    cost = pl.CostEstimate(flops=0, transcendentals=0, bytes_accessed=int(total_bytes))

    # Main-path gate: the in-kernel (T, dW, bs*C) -> (T*dW, bs*C) merge is a free,
    # always-supported relayout when dW is a multiple of the sublane packing, and the
    # 2-D transpose wants a sublane-aligned (bs*C).
    sublane = 8 * max(1, 4 // in_isz)           # 8 for f32, 16 for bf16, 32 for int8
    use_main = (dW % sublane == 0) and ((bs * C) % 8 == 0)

    if use_main:
        # Tile the dH axis.  Legal tiles: T divides dH and the output block's minor
        # dim T*dW is either a multiple of 128 (unmasked lane-dense stores) or full.
        unit = dW * bs * C * (in_isz + out_isz)        # in+out bytes per dh-row slab
        allowed = [T for T in _divisors_desc(dH) if (T * dW) % 128 == 0 or T == dH]
        T = _pick_tile(dH, allowed, unit, budget, B * bs, _MIN_GRID_STEPS_MAIN)

        in_tile = T * dW * bs * C * in_isz
        out_tile = bs * C * T * dW * out_isz
        # double-buffered in+out, plus ~one out-tile for the transpose temp, plus headroom
        vmem_limit = 2 * (in_tile + out_tile) + out_tile + (8 << 20)
        vmem_limit = int(min(max(vmem_limit, 32 << 20), vmem_cap_limit))

        # The ONLY materialized permutation: a standard NCHW -> NHWC transpose.
        # (Deliberately NOT fused into the kernel: fusing it would turn the block DMA
        # into element-granular strided HBM reads.)
        x_nhwc = jnp.transpose(x_nchw, (0, 2, 3, 1))          # (B, H, W, C)
        xv = x_nhwc.reshape(B, dH, bs, dW, bs * C)            # free view: (dh, bh, dw, bw*C+c)

        grid = (B, bs, dH // T)
        out = pl.pallas_call(
            _s2d_transpose_kernel,
            out_shape=jax.ShapeDtypeStruct((B, bs, bs * C, dH * dW), out_dtype),
            grid_spec=pltpu.PrefetchScalarGridSpec(
                num_scalar_prefetch=0,
                grid=grid,
                in_specs=[pl.BlockSpec((1, T, 1, dW, bs * C),
                                       lambda b, bh, t: (b, t, bh, 0, 0))],
                out_specs=pl.BlockSpec((1, 1, bs * C, T * dW),
                                       lambda b, bh, t: (b, bh, 0, t)),
            ),
            compiler_params=pltpu.CompilerParams(
                dimension_semantics=("parallel", "parallel", "parallel"),
                vmem_limit_bytes=vmem_limit),
            cost_estimate=cost,
        )(xv)
        # Row-major merge of (bh, bw*C+c) -> D and split of dH*dW -> (dH, dW): free.
        return out.reshape(B, D, dH, dW)

    # Fallback for layout-hostile shapes (e.g. C=3 RGB, dW not sublane-aligned):
    # XLA performs the full permutation once; the kernel is a tiled copy + f32 cast
    # writing NCHW directly (no output-side transpose).  Blocks keep the full
    # (dH, dW) trailing dims so they are always legal; tiling is over channels.
    xp = jnp.transpose(x_nchw.reshape(B, C, dH, bs, dW, bs),
                       (0, 3, 5, 1, 2, 4)).reshape(B, D, dH, dW)
    unit = dH * dW * (in_isz + out_isz)
    Tc = _pick_tile(D, _divisors_desc(D), unit, budget, B, _MIN_GRID_STEPS_FALLBACK)
    vmem_limit = int(min(max(3 * Tc * unit + (8 << 20), 32 << 20), vmem_cap_limit))
    out = pl.pallas_call(
        _cast_copy_kernel,
        out_shape=jax.ShapeDtypeStruct((B, D, dH, dW), out_dtype),
        grid_spec=pltpu.PrefetchScalarGridSpec(
            num_scalar_prefetch=0,
            grid=(B, D // Tc),
            in_specs=[pl.BlockSpec((1, Tc, dH, dW), lambda b, c: (b, c, 0, 0))],
            out_specs=pl.BlockSpec((1, Tc, dH, dW), lambda b, c: (b, c, 0, 0)),
        ),
        compiler_params=pltpu.CompilerParams(
            dimension_semantics=("parallel", "parallel"),
            vmem_limit_bytes=vmem_limit),
        cost_estimate=cost,
    )(xp)
    # TODO(synk): the PyTorch backward hook / `inverse` in-place memory-release trick
    # only affects training-time memory, never forward values; not translated.
    return out


def _reference_space_to_depth(x, bs):
    B, C, H, W = x.shape
    dH, dW = H // bs, W // bs
    y = jnp.transpose(x, (0, 2, 3, 1)).reshape(B, dH, bs, dW, bs, C)
    y = jnp.transpose(y, (0, 1, 3, 2, 4, 5)).reshape(B, dH, dW, bs * bs * C)
    return jnp.transpose(y, (0, 3, 1, 2)).astype(jnp.float32)


if __name__ == "__main__":
    root = jax.random.PRNGKey(0)
    configs = [
        # (B, C, H, W, block_size)
        (2, 4, 16, 16, 2),      # small, main path (only T == dH legal)
        (2, 64, 64, 64, 2),     # lane-aligned main path, multiple dH tiles
        (1, 64, 128, 128, 2),   # single image: min-grid-steps logic engages
        (2, 8, 32, 32, 4),      # block_size = 4
        (1, 3, 12, 12, 2),      # RGB / unaligned -> fallback copy+cast path
    ]
    for i, (B, C, H, W, bs) in enumerate(configs):
        key = jax.random.fold_in(root, i)
        x = jax.random.normal(key, (B, C, H, W), dtype=jnp.float32)
        out = jax.block_until_ready(shape_pool_2d(x, bs))
        expected = _reference_space_to_depth(x, bs)
        assert out.shape == (B, C * bs * bs, H // bs, W // bs), (i, out.shape)
        assert out.dtype == jnp.float32
        assert bool(jnp.array_equal(out, expected)), f"mismatch vs reference (config {i})"
    print("KERNEL_OK")
</pallas_src>

<mosaic_0001>
module attributes {stable_mosaic.version = 11 : i64} {
  func.func @_s2d_transpose_kernel(%arg0: i32, %arg1: i32, %arg2: i32, %arg3: memref<1x8x1x8x8xf32, #tpu.memory_space<vmem>>, %arg4: memref<1x1x8x64xf32, #tpu.memory_space<vmem>>) attributes {dimension_semantics = [#tpu.dimension_semantics<parallel>, #tpu.dimension_semantics<parallel>, #tpu.dimension_semantics<parallel>], iteration_bounds = array<i64: 2, 2, 1>, scalar_prefetch = 0 : i64, scratch_operands = 0 : i64, tpu.core_type = #tpu.core_type<tc>, window_params = [{transform_indices = @transform_0, window_bounds = array<i64: 1, 8, 1, 8, 8>}, {transform_indices = @transform_1, window_bounds = array<i64: 1, 1, 8, 64>}]} {
    %c0 = arith.constant 0 : index
    %c0_0 = arith.constant 0 : index
    %c0_1 = arith.constant 0 : index
    %c0_2 = arith.constant 0 : index
    %c0_3 = arith.constant 0 : index
    %0 = vector.load %arg3[%c0, %c0_0, %c0_1, %c0_2, %c0_3] : memref<1x8x1x8x8xf32, #tpu.memory_space<vmem>>, vector<1x8x1x8x8xf32>
    %1 = vector.shape_cast %0 : vector<1x8x1x8x8xf32> to vector<8x8x8xf32>
    %2 = vector.shape_cast %1 : vector<8x8x8xf32> to vector<64x8xf32>
    %3 = tpu.transpose %2, [1, 0] : vector<64x8xf32> -> vector<8x64xf32>
    %c0_4 = arith.constant 0 : index
    %c0_5 = arith.constant 0 : index
    %c0_6 = arith.constant 0 : index
    %c0_7 = arith.constant 0 : index
    %4 = vector.load %arg4[%c0_4, %c0_5, %c0_6, %c0_7] : memref<1x1x8x64xf32, #tpu.memory_space<vmem>>, vector<1x1x8x64xf32>
    %5 = vector.shape_cast %4 : vector<1x1x8x64xf32> to vector<8x64xf32>
    %6 = vector.shape_cast %3 : vector<8x64xf32> to vector<1x1x8x64xf32>
    tpu.vector_store %arg4[%c0_4, %c0_5, %c0_6, %c0_7], %6 {strides = array<i32>} : memref<1x1x8x64xf32, #tpu.memory_space<vmem>>, vector<1x1x8x64xf32>,
    return
  }
  func.func @transform_0(%arg0: i32, %arg1: i32, %arg2: i32) -> (i32, i32, i32, i32, i32) {
    %c0_i32 = arith.constant 0 : i32
    %c0_i32_0 = arith.constant 0 : i32
    %c0_i32_1 = arith.constant 0 : i32
    return %arg0, %arg2, %arg1, %c0_i32, %c0_i32_0 : i32, i32, i32, i32, i32
  }
  func.func @transform_1(%arg0: i32, %arg1: i32, %arg2: i32) -> (i32, i32, i32, i32) {
    %c0_i32 = arith.constant 0 : i32
    %c0_i32_0 = arith.constant 0 : i32
    return %arg0, %arg1, %c0_i32, %arg2 : i32, i32, i32, i32
  }
}

</mosaic_0001>

<llo_original>
// kernel: shape_pool_2d.1
$region0: #{shape_pool_2d.1}
  #allocation0 [shape = 'u32[]', space=smem, size = 0x4, offset = 0x4, fixed_abs, tag = 'smem constant byte address 0x4 - core index']
  #allocation1 [shape = 'u32[72,128]{1,0:T(1,128)}', space=vmem, size = 0x9000, scoped, tag = 'internal scratch']
  %s0 = inlined_call_operand.vmem [shape: f32[2,8,2,8,8], index: 0, kind: input, shape index: {}]
  %s1 = inlined_call_operand.vmem [shape: f32[2,2,8,64], index: 1, kind: output, shape index: {}]
  %s2 = sld [smem:[#allocation0]]
  $region75: #{shape_pool_2d.1} parent=0
    _
  %s4 = ssub.s32 1, %s2
  %s5 = scalar_select 0, %s4, %s2
  $region1: #{shape_pool_2d.1} parent=0
    #allocation2 [shape = 'u8[65536]{0}', space=vmem, size = 0x10000, scoped, tag = 'input window, operand 0']
    loop: start=0, step=1, limit=6
    $region2: #{shape_pool_2d.1} parent=1 // loop_pre_header
      _
    $region3: #{shape_pool_2d.1} parent=1 // loop_header
      %s7 = sphi 0, %s11
      %p8 = scmp.ge.s32.totalorder %s7, 6
      %s14 = sphi 0, %s33
      %s15 = sphi 0, %s29
      %s16 = sphi 0, %s25
      %s17 = sphi 0, %s14
      %s18 = sphi 0, %s15
      %s19 = sphi 0, %s16
      %s20 = sphi 0, %s17
      %s21 = sphi 0, %s18
      %s22 = sphi 0, %s19
      %s40 = sphi 0, %s42
      %s43 = sphi 0, %s40
      %s44 = sphi 0, %s43
      %s60 = sphi 0, %s44
      %s70 = sphi 0, %s72
      %s73 = sphi 0, %s70
      %s74 = sphi 0, %s73
      %s90 = sphi 0, %s74
    $region4: #{shape_pool_2d.1} parent=1 // loop_header_branch
      %10 = sbr.rel (%p8) target = $region8
    $region5: #{shape_pool_2d.1} parent=1 // loop_body
      %s12 = ssub.s32 %s7, 1
      %s13 = ssub.s32 %s7, 2
      %s23 = sadd.s32 1, %s16
      %p24 = scmp.ge.s32.totalorder %s23, 1
      %s25 = scalar_select %p24, 0, %s23
      %s26 = sadd.s32 1, %s15
      %s27 = scalar_select %p24, %s26, %s15
      %p28 = scmp.ge.s32.totalorder %s27, 2
      %s29 = scalar_select %p28, 0, %s27
      %s30 = sadd.s32 1, %s14
      %s31 = scalar_select %p28, %s30, %s14
      %p32 = scmp.ge.s32.totalorder %s31, 2
      %s33 = scalar_select %p32, 0, %s31
      %s34 = ssub.s32 %s14, %s33
      %s35 = ssub.s32 %s16, %s25
      %s36 = sor.u32 %s34, %s35
      %s37 = ssub.s32 %s15, %s29
      %s38 = sor.u32 %s36, %s37
      %p39 = scmp.eq.s32.totalorder %s38, 0
      %s41 = sadd.s32 %s40, 1
      %s42 = scalar_select %p39, %s40, %s41
      %p45 = pneg %p39
      %p46 = scmp.eq.s32.totalorder %s7, 3
      %p47 = por %p45, %p46
      %p48 = scmp.ne.s32.totalorder %s40, %s43
      %p49 = scmp.eq.s32.totalorder %s7, 0
      %p50 = por %p48, %p49
      %p51 = scmp.ne.s32.totalorder %s40, %s43
      %p52 = scmp.eq.s32.totalorder %s12, 3
      %p53 = por %p51, %p52
      %p54 = scmp.ne.s32.totalorder %s43, %s44
      %p55 = scmp.eq.s32.totalorder %s12, 0
      %p56 = por %p54, %p55
      %p57 = scmp.ne.s32.totalorder %s43, %s44
      %p58 = scmp.eq.s32.totalorder %s13, 3
      %p59 = por %p57, %p58
      %p61 = scmp.ne.s32.totalorder %s44, %s60
      %p62 = scmp.eq.s32.totalorder %s13, 0
      %p63 = por %p61, %p62
      %s64 = ssub.s32 %s14, %s33
      %s65 = ssub.s32 %s15, %s29
      %s66 = sor.u32 %s64, %s65
      %s67 = ssub.s32 %s16, %s25
      %s68 = sor.u32 %s66, %s67
      %p69 = scmp.eq.s32.totalorder %s68, 0
      %s71 = sadd.s32 %s70, 1
      %s72 = scalar_select %p69, %s70, %s71
      %p75 = pneg %p69
      %p76 = scmp.eq.s32.totalorder %s7, 3
      %p77 = por %p75, %p76
      %p78 = scmp.ne.s32.totalorder %s70, %s73
      %p79 = scmp.eq.s32.totalorder %s7, 0
      %p80 = por %p78, %p79
      %p81 = scmp.ne.s32.totalorder %s70, %s73
      %p82 = scmp.eq.s32.totalorder %s12, 3
      %p83 = por %p81, %p82
      %p84 = scmp.ne.s32.totalorder %s73, %s74
      %p85 = scmp.eq.s32.totalorder %s12, 0
      %p86 = por %p84, %p85
      %p87 = scmp.ne.s32.totalorder %s73, %s74
      %p88 = scmp.eq.s32.totalorder %s13, 3
      %p89 = por %p87, %p88
      %p91 = scmp.ne.s32.totalorder %s74, %s90
      %p92 = scmp.eq.s32.totalorder %s13, 0
      %p93 = por %p91, %p92
      %p94 = scmp.le.s32.totalorder 1, %s7
      %p95 = scmp.lt.s32.totalorder %s7, 5
      %p96 = pnand %p94, %p95
      %p97 = pneg %p96
      // Predicated region
      $region9: #{shape_pool_2d.1} parent=5 // pred_check
        _
      $region10: #{shape_pool_2d.1} parent=5 // pred_check_branch
        %99 = sbr.rel (%p96) target = $region12
      $region11: #{shape_pool_2d.1} parent=5 // pred_region
        %s100 = ssub.s32 %s7, 1
      $region12: #{shape_pool_2d.1} parent=5 // pred_fallthru
        _
      %p101 = scmp.lt.s32.totalorder %s7, 4
      // Predicated region
      $region13: #{shape_pool_2d.1} parent=5 // pred_check
        %p102 = pneg %p101
      $region14: #{shape_pool_2d.1} parent=5 // pred_check_branch
        %104 = sbr.rel (%p102) target = $region16
      $region15: #{shape_pool_2d.1} parent=5 // pred_region
        // Predicated region
        $region17: #{shape_pool_2d.1} parent=15 // pred_check
          %p105 = pneg %p50
        $region18: #{shape_pool_2d.1} parent=15 // pred_check_branch
          %107 = sbr.rel (%p105) target = $region20
        $region19: #{shape_pool_2d.1} parent=15 // pred_region
          %s108 = sand.u32 %s40, 1
          %s109 = sand.u32 %s40, 1
          %s110 = smul.addr %s109, 64
          %s111 = scalar_lea.vmem [#allocation2], %s110
          %s112 = smul.u32 8, %s16
          %s113 = smul.addr %s112, 2
          %s114 = sadd.s32 %s15, %s113
          %s115 = smul.addr %s14, 16
          %s116 = sadd.s32 %s114, %s115
          %s117 = smul.addr %s116, 8
          %s118 = scalar_lea.vmem %s0, %s117
          // Predicated region
          $region21: #{shape_pool_2d.1} parent=19 // pred_check
            _
          $region22: #{shape_pool_2d.1} parent=19 // pred_check_branch
            %120 = sbr.rel (0) target = $region24
          $region23: #{shape_pool_2d.1} parent=19 // pred_region
            // Predicated region
            $region25: #{shape_pool_2d.1} parent=23 // pred_check
              _
            $region26: #{shape_pool_2d.1} parent=23 // pred_check_branch
              %122 = sbr.rel (0) target = $region28
            $region27: #{shape_pool_2d.1} parent=23 // pred_region
              // Predicated region
              $region40: #{shape_pool_2d.1} parent=27 // pred_check
                _
              $region41: #{shape_pool_2d.1} parent=27 // pred_check_branch
                %152 = sbr.rel (0) target = $region43
              $region42: #{shape_pool_2d.1} parent=27 // pred_region
                loop: start=0, step=1, limit=1
                $region44: #{shape_pool_2d.1} parent=42 // loop_pre_header
                  _
                $region45: #{shape_pool_2d.1} parent=42 // loop_header
                  %s154 = sphi 0, %s158
                  %p155 = scmp.ge.s32.totalorder %s154, 1
                  %s159 = sphi %s118, %s118
                  %s160 = sphi %s111, %s111
                $region46: #{shape_pool_2d.1} parent=42 // loop_header_branch
                  %157 = sbr.rel (%p155) target = $region50
                $region47: #{shape_pool_2d.1} parent=42 // loop_body
                  %v161 = vld [vmem:[%s159] sm:$0xff]
                  %162 = vst [vmem:[%s160] sm:$0xff] %v161
                  %v163 = vld [vmem:[%s159 + $0x10] sm:$0xff]
                  %164 = vst [vmem:[%s160 + $0x8] sm:$0xff] %v163
                  %v165 = vld [vmem:[%s159 + $0x20] sm:$0xff]
                  %166 = vst [vmem:[%s160 + $0x10] sm:$0xff] %v165
                  %v167 = vld [vmem:[%s159 + $0x30] sm:$0xff]
                  %168 = vst [vmem:[%s160 + $0x18] sm:$0xff] %v167
                  %v169 = vld [vmem:[%s159 + $0x40] sm:$0xff]
                  %170 = vst [vmem:[%s160 + $0x20] sm:$0xff] %v169
                  %v171 = vld [vmem:[%s159 + $0x50] sm:$0xff]
                  %172 = vst [vmem:[%s160 + $0x28] sm:$0xff] %v171
                  %v173 = vld [vmem:[%s159 + $0x60] sm:$0xff]
                  %174 = vst [vmem:[%s160 + $0x30] sm:$0xff] %v173
                  %v175 = vld [vmem:[%s159 + $0x70] sm:$0xff]
                  %176 = vst [vmem:[%s160 + $0x38] sm:$0xff] %v175
                $region48: #{shape_pool_2d.1} parent=42 // loop_footer
                  %s158 = sadd.s32 1, %s154
                $region49: #{shape_pool_2d.1} parent=42 // loop_footer_branch
                  %153 = sbr.rel target = $region45
                $region50: #{shape_pool_2d.1} parent=42 // loop_exit
                  _
              $region43: #{shape_pool_2d.1} parent=27 // pred_fallthru
                _
              // Predicated region
              $region51: #{shape_pool_2d.1} parent=27 // pred_check
                _
              $region52: #{shape_pool_2d.1} parent=27 // pred_check_branch
                %178 = sbr.rel target = $region54
              $region53: #{shape_pool_2d.1} parent=27 // pred_region
                _
              $region54: #{shape_pool_2d.1} parent=27 // pred_fallthru
                _
            $region28: #{shape_pool_2d.1} parent=23 // pred_fallthru
              _
            // Predicated region
            $region29: #{shape_pool_2d.1} parent=23 // pred_check
              _
            $region30: #{shape_pool_2d.1} parent=23 // pred_check_branch
              %124 = sbr.rel target = $region32
            $region31: #{shape_pool_2d.1} parent=23 // pred_region
              %s126 = ssub.s32 256, 1
              loop: start=0, step=1, limit=1
              $region33: #{shape_pool_2d.1} parent=31 // loop_pre_header
                _
              $region34: #{shape_pool_2d.1} parent=31 // loop_header
                %s128 = sphi 0, %s132
                %p129 = scmp.ge.s32.totalorder %s128, 1
                %s133 = sphi %s118, %s118
                %s134 = sphi %s111, %s111
              $region35: #{shape_pool_2d.1} parent=31 // loop_header_branch
                %131 = sbr.rel (%p129) target = $region39
              $region36: #{shape_pool_2d.1} parent=31 // loop_body
                %v135 = vld [vmem:[%s133] sm:%s126]
                %136 = vst [vmem:[%s134] sm:%s126] %v135
                %v137 = vld [vmem:[%s133 + $0x10] sm:%s126]
                %138 = vst [vmem:[%s134 + $0x8] sm:%s126] %v137
                %v139 = vld [vmem:[%s133 + $0x20] sm:%s126]
                %140 = vst [vmem:[%s134 + $0x10] sm:%s126] %v139
                %v141 = vld [vmem:[%s133 + $0x30] sm:%s126]
                %142 = vst [vmem:[%s134 + $0x18] sm:%s126] %v141
                %v143 = vld [vmem:[%s133 + $0x40] sm:%s126]
                %144 = vst [vmem:[%s134 + $0x20] sm:%s126] %v143
                %v145 = vld [vmem:[%s133 + $0x50] sm:%s126]
                %146 = vst [vmem:[%s134 + $0x28] sm:%s126] %v145
                %v147 = vld [vmem:[%s133 + $0x60] sm:%s126]
                %148 = vst [vmem:[%s134 + $0x30] sm:%s126] %v147
                %v149 = vld [vmem:[%s133 + $0x70] sm:%s126]
                %150 = vst [vmem:[%s134 + $0x38] sm:%s126] %v149
              $region37: #{shape_pool_2d.1} parent=31 // loop_footer
                %s132 = sadd.s32 1, %s128
              $region38: #{shape_pool_2d.1} parent=31 // loop_footer_branch
                %127 = sbr.rel target = $region34
              $region39: #{shape_pool_2d.1} parent=31 // loop_exit
                _
            $region32: #{shape_pool_2d.1} parent=23 // pred_fallthru
              _
          $region24: #{shape_pool_2d.1} parent=19 // pred_fallthru
            _
          %179 = vnop
        $region20: #{shape_pool_2d.1} parent=15 // pred_fallthru
          _
      $region16: #{shape_pool_2d.1} parent=5 // pred_fallthru
        _
      %p180 = scmp.le.s32.totalorder 1, %s7
      %p181 = scmp.lt.s32.totalorder %s7, 5
      %p182 = pnand %p180, %p181
      %p183 = pneg %p182
      // Predicated region
      $region55: #{shape_pool_2d.1} parent=5 // pred_check
        _
      $region56: #{shape_pool_2d.1} parent=5 // pred_check_branch
        %185 = sbr.rel (%p182) target = $region58
      $region57: #{shape_pool_2d.1} parent=5 // pred_region
        %s186 = ssub.s32 %s7, 1
        %s187 = sand.u32 %s43, 1
        %s188 = sand.u32 %s43, 1
        %s189 = smul.addr %s188, 64
        %s190 = scalar_lea.vmem [#allocation2], %s189
        // Predicated region
        $region59: #{shape_pool_2d.1} parent=57 // pred_check
          %p191 = pneg %p56
        $region60: #{shape_pool_2d.1} parent=57 // pred_check_branch
          %193 = sbr.rel (%p191) target = $region62
        $region61: #{shape_pool_2d.1} parent=57 // pred_region
          _
        $region62: #{shape_pool_2d.1} parent=57 // pred_fallthru
          _
        %s194 = sand.u32 %s43, 1
        %s195 = sand.u32 %s43, 1
        %s196 = smul.addr %s195, 64
        %s197 = scalar_lea.vmem [#allocation2], %s196
        %p198 = pneg %p56
        %p199 = pneg %p53
        %p200 = pneg %p86
        %p201 = pneg %p83
        %p202 = scmp.lt.s32.totalorder %s17, 1
        %s203 = scalar_select %p202, %s17, 1
        %p204 = scmp.lt.s32.totalorder %s18, 1
        %s205 = scalar_select %p204, %s18, 1
        %p206 = scmp.lt.s32.totalorder %s19, 0
        %s207 = scalar_select %p206, %s19, 0
        %s208 = sadd.s32 %s207, %s205
        %s209 = smul.addr %s203, 2
        %s210 = sadd.s32 %s208, %s209
        %s211 = smul.addr %s210, 8
        %s212 = scalar_lea.vmem %s1, %s211
        %s213 = smul.u32 8, %s19
        %p214 = scmp.lt.s32.totalorder %s17, 1
        %s215 = scalar_select %p214, %s17, 1
        %p216 = scmp.lt.s32.totalorder %s18, 1
        %s217 = scalar_select %p216, %s18, 1
        %p218 = scmp.lt.s32.totalorder %s19, 0
        %s219 = scalar_select %p218, %s19, 0
        %s220 = sadd.s32 %s219, %s217
        %s221 = smul.addr %s215, 2
        %s222 = sadd.s32 %s220, %s221
        %s223 = smul.addr %s222, 8
        %s224 = scalar_lea.vmem %s1, %s223
        %v225 = vld [vmem:[%s190] sm:$0xff]
        %v226 = vld [vmem:[%s190 + $0x8] sm:$0xff]
        %v227 = vld [vmem:[%s190 + $0x10] sm:$0xff]
        %v228 = vld [vmem:[%s190 + $0x18] sm:$0xff]
        %v229 = vld [vmem:[%s190 + $0x20] sm:$0xff]
        %v230 = vld [vmem:[%s190 + $0x28] sm:$0xff]
        %v231 = vld [vmem:[%s190 + $0x30] sm:$0xff]
        %v232 = vld [vmem:[%s190 + $0x38] sm:$0xff]
        %233 = vxpose.xlu0.b32.start [1/16] %v225, 128
        %234 = vxpose.xlu0.b32.cont [2/16] %v226, 128
        %235 = vxpose.xlu0.b32.cont [3/16] %v227, 128
        %236 = vxpose.xlu0.b32.cont [4/16] %v228, 128
        %237 = vxpose.xlu0.b32.cont [5/16] %v229, 128
        %238 = vxpose.xlu0.b32.cont [6/16] %v230, 128
        %239 = vxpose.xlu0.b32.cont [7/16] %v231, 128
        %240 = vxpose.xlu0.b32.cont [8/16] %v232, 128
        %241 = vxpose.xlu0.b32.cont [9/16] 0.0, 128
        %242 = vxpose.xlu0.b32.cont [10/16] 0.0, 128
        %243 = vxpose.xlu0.b32.cont [11/16] 0.0, 128
        %244 = vxpose.xlu0.b32.cont [12/16] 0.0, 128
        %245 = vxpose.xlu0.b32.cont [13/16] 0.0, 128
        %246 = vxpose.xlu0.b32.cont [14/16] 0.0, 128
        %247 = vxpose.xlu0.b32.cont [15/16] 0.0, 128
        %248 = vxpose.xlu0.b32.end [16/16] 0.0, 128
        %v249 = vpop.trf.xlu0
        %v250 = vpop.trf.xlu0
        %v251 = vpop.trf.xlu0
        %v252 = vpop.trf.xlu0
        %v253 = vpop.trf.xlu0
        %v254 = vpop.trf.xlu0
        %v255 = vpop.trf.xlu0
        %v256 = vpop.trf.xlu0
        %v257 = vpop.trf.xlu0
        %v258 = vpop.trf.xlu0
        %v259 = vpop.trf.xlu0
        %v260 = vpop.trf.xlu0
        %v261 = vpop.trf.xlu0
        %v262 = vpop.trf.xlu0
        %v263 = vpop.trf.xlu0
        %v264 = vpop.trf.xlu0
        %vm265 = vcmask 523264
        %266 = vst.msk [vmem:[%s224] sm:$0xff] %vm265, %v249
        %p267 = scmp.lt.s32.totalorder %s17, 1
        %s268 = scalar_select %p267, %s17, 1
        %p269 = scmp.lt.s32.totalorder %s18, 1
        %s270 = scalar_select %p269, %s18, 1
        %p271 = scmp.lt.s32.totalorder %s19, 0
        %s272 = scalar_select %p271, %s19, 0
        %s273 = sadd.s32 %s272, %s270
        %s274 = smul.addr %s268, 2
        %s275 = sadd.s32 %s273, %s274
        %s276 = smul.addr %s275, 8
        %s277 = scalar_lea.vmem %s1, %s276
        // Predicated region
        $region63: #{shape_pool_2d.1} parent=57 // pred_check
          %p278 = pneg %p83
        $region64: #{shape_pool_2d.1} parent=57 // pred_check_branch
          %280 = sbr.rel (%p278) target = $region66
        $region65: #{shape_pool_2d.1} parent=57 // pred_region
          _
        $region66: #{shape_pool_2d.1} parent=57 // pred_fallthru
          _
      $region58: #{shape_pool_2d.1} parent=5 // pred_fallthru
        _
      %p281 = scmp.le.s32.totalorder 2, %s7
      // Predicated region
      $region67: #{shape_pool_2d.1} parent=5 // pred_check
        %p282 = pneg %p281
      $region68: #{shape_pool_2d.1} parent=5 // pred_check_branch
        %284 = sbr.rel (%p282) target = $region70
      $region69: #{shape_pool_2d.1} parent=5 // pred_region
        %s285 = ssub.s32 %s7, 2
        // Predicated region
        $region71: #{shape_pool_2d.1} parent=69 // pred_check
          %p286 = pneg %p89
        $region72: #{shape_pool_2d.1} parent=69 // pred_check_branch
          %288 = sbr.rel (%p286) target = $region74
        $region73: #{shape_pool_2d.1} parent=69 // pred_region
          %p289 = scmp.lt.s32.totalorder %s20, 1
          %s290 = scalar_select %p289, %s20, 1
          %p291 = scmp.lt.s32.totalorder %s21, 1
          %s292 = scalar_select %p291, %s21, 1
          %p293 = scmp.lt.s32.totalorder %s22, 0
          %s294 = scalar_select %p293, %s22, 0
          %s295 = sadd.s32 %s294, %s292
          %s296 = smul.addr %s290, 2
          %s297 = sadd.s32 %s295, %s296
          %s298 = smul.addr %s297, 8
          %s299 = scalar_lea.vmem %s1, %s298
        $region74: #{shape_pool_2d.1} parent=69 // pred_fallthru
          _
      $region70: #{shape_pool_2d.1} parent=5 // pred_fallthru
        _
    $region6: #{shape_pool_2d.1} parent=1 // loop_footer
      %s11 = sadd.s32 1, %s7
    $region7: #{shape_pool_2d.1} parent=1 // loop_footer_branch
      %6 = sbr.rel target = $region3
    $region8: #{shape_pool_2d.1} parent=1 // loop_exit
      _

</llo_original>
